<compile_context>
chip_gen: v7x
topology: tpu7x:2x2x1
jax: 0.10.0
libtpu: 0.0.40
codegen_flags: <defaults>
</compile_context>

<pallas_src>
import functools

import jax
import jax.numpy as jnp
from jax.experimental import pallas as pl
from jax.experimental.pallas import tpu as pltpu

LANES = 128
TILE_BYTES_PER_INPUT = 1 << 20  # ~1 MiB per input per pipeline buffer


def _round_up(x, m):
    return ((x + m - 1) // m) * m


def _pdl_partial_kernel(rvv_ref, rvh_ref, fvv_ref, fvh_ref, part_ref, *,
                        mode, rows_total, row_tile, ragged):
    # Inner VV-VH subtractions in the native dtype (bf16 VALU on v6e/v7x);
    # cast to f32 for the outer diff / abs / square / accumulation.
    real_diff = (rvv_ref[...] - rvh_ref[...]).astype(jnp.float32)
    fake_diff = (fvv_ref[...] - fvh_ref[...]).astype(jnp.float32)
    d = fake_diff - real_diff
    if mode == "l1":
        val = jnp.abs(d)
    elif mode == "l2":
        val = d * d
    else:
        raise ValueError("Unsupported loss mode")

    def store(v):
        r = v.shape[0]
        if r % 8 == 0:
            # (row_tile, 128) -> (8, 128) partial with pure VPU vreg adds
            # (no per-step cross-lane XLU reduce, no scalar serialization).
            part_ref[...] = jnp.sum(v.reshape(r // 8, 8, LANES), axis=0)
        else:
            # Tiny single-block case (rows < 2*sub): one small cross-sublane
            # reduce; performance is irrelevant at this size.
            part_ref[...] = jnp.zeros((8, LANES), jnp.float32)
            part_ref[0:1, :] = jnp.sum(v, axis=0, keepdims=True)

    if not ragged:
        # Statically known: every block is fully in-bounds -> zero mask cost.
        store(val)
    else:
        i = pl.program_id(0)
        is_last = i == pl.num_programs(0) - 1

        @pl.when(jnp.logical_not(is_last))
        def _():
            store(val)

        @pl.when(is_last)
        def _():
            # The last block extends past rows_total; its out-of-bounds rows
            # contain unspecified data (inputs are NOT padded) -> mask to 0.
            row = i * row_tile + jax.lax.broadcasted_iota(jnp.int32, val.shape, 0)
            store(jnp.where(row < rows_total, val, 0.0))


def pairwise_difference_loss(real_VV, real_VH, fake_VV, fake_VH, mode="l1"):
    """JAX/Pallas equivalent of PairwiseDifferenceLoss.forward.

    All inputs are [B, C, H, W] with identical shapes/dtypes.
    Returns a scalar float32 loss.
    """
    if mode not in ("l1", "l2"):
        raise ValueError("Unsupported loss mode")
    assert real_VV.shape == real_VH.shape == fake_VV.shape == fake_VH.shape
    assert real_VV.dtype == real_VH.dtype == fake_VV.dtype == fake_VH.dtype

    total = real_VV.size
    itemsize = jnp.dtype(real_VV.dtype).itemsize
    # Sublane packing minimum: 8 rows f32, 16 bf16/fp16, 32 for 8-bit dtypes.
    sub = max(8, 8 * (4 // max(1, itemsize)))

    rows = pl.cdiv(total, LANES)
    # ~1 MiB per input per pipeline buffer: f32 -> 2048 rows, bf16 -> 4096.
    default_rows = max(sub, TILE_BYTES_PER_INPUT // (LANES * itemsize))

    # Balanced tiles: decide the tile count first, then the (sub-aligned) tile
    # size, so masked waste stays < sub rows instead of up to a full tile.
    num_tiles = pl.cdiv(rows, default_rows)
    if num_tiles == 1:
        if rows > 2 * sub:
            # Keep >= 2 grid tiles so v7x's two TensorCores both get work
            # (the "parallel" grid axis is sharded across cores).
            num_tiles = 2
            row_tile = _round_up(pl.cdiv(rows, 2), sub)
        else:
            # Tiny input: a single full-extent block (always legal, no mask).
            row_tile = rows
    else:
        row_tile = _round_up(pl.cdiv(rows, num_tiles), sub)

    # Only the last block can extend past `rows`; handled by in-kernel masking.
    ragged = num_tiles * row_tile > rows

    lane_pad = rows * LANES - total  # < 128; non-zero only if total % 128 != 0

    def flat(x):
        xf = x.reshape(-1)  # layout-preserving, no copy
        if lane_pad:
            # TODO(synk): only sizes not divisible by 128 take this (copying)
            # pad of < 128 zero elements; expressing the ragged lane tail
            # without a copy would require a 1-D block layout.  All
            # 128-divisible inputs take the zero-copy path above.
            xf = jnp.pad(xf, (0, lane_pad))
        return xf.reshape(rows, LANES)

    tile_spec = pl.BlockSpec((row_tile, LANES), lambda i: (i, 0))
    kernel = functools.partial(_pdl_partial_kernel, mode=mode, rows_total=rows,
                               row_tile=row_tile, ragged=ragged)

    partials = pl.pallas_call(
        kernel,
        out_shape=jax.ShapeDtypeStruct((num_tiles, 8, LANES), jnp.float32),
        grid_spec=pl.GridSpec(
            grid=(num_tiles,),
            in_specs=[tile_spec, tile_spec, tile_spec, tile_spec],
            out_specs=pl.BlockSpec((None, 8, LANES), lambda i: (i, 0, 0)),
        ),
        compiler_params=pltpu.CompilerParams(
            dimension_semantics=("parallel",),
            vmem_limit_bytes=32 * 1024 * 1024,
        ),
    )(flat(real_VV), flat(real_VH), flat(fake_VV), flat(fake_VH))

    # One tiny cross-lane reduction + mean (by the true element count).
    return jnp.sum(partials) / jnp.float32(total)


if __name__ == "__main__":
    key = jax.random.PRNGKey(0)
    k1, k2, k3, k4 = jax.random.split(key, 4)

    # [B, C, H, W] — aligned case (zero-copy, single full-extent block).
    B, C, H, W = 2, 4, 16, 16
    real_VV = jax.random.normal(k1, (B, C, H, W), dtype=jnp.float32)
    real_VH = jax.random.normal(k2, (B, C, H, W), dtype=jnp.float32)
    fake_VV = jax.random.normal(k3, (B, C, H, W), dtype=jnp.float32)
    fake_VH = jax.random.normal(k4, (B, C, H, W), dtype=jnp.float32)

    loss_l1 = jax.block_until_ready(
        pairwise_difference_loss(real_VV, real_VH, fake_VV, fake_VH, mode="l1"))
    loss_l2 = jax.block_until_ready(
        pairwise_difference_loss(real_VV, real_VH, fake_VV, fake_VH, mode="l2"))

    ref_l1 = jnp.mean(jnp.abs((fake_VV - fake_VH) - (real_VV - real_VH)))
    ref_l2 = jnp.mean(((fake_VV - fake_VH) - (real_VV - real_VH)) ** 2)
    assert jnp.allclose(loss_l1, ref_l1, rtol=1e-5, atol=1e-6), (loss_l1, ref_l1)
    assert jnp.allclose(loss_l2, ref_l2, rtol=1e-5, atol=1e-6), (loss_l2, ref_l2)

    # Odd (non 128-divisible) shape — exercises the minimal lane-pad path.
    odd = (2, 3, 7, 5)
    ovv, ovh = jax.random.normal(k1, odd), jax.random.normal(k2, odd)
    fvv, fvh = jax.random.normal(k3, odd), jax.random.normal(k4, odd)
    loss_odd = jax.block_until_ready(
        pairwise_difference_loss(ovv, ovh, fvv, fvh, mode="l1"))
    ref_odd = jnp.mean(jnp.abs((fvv - fvh) - (ovv - ovh)))
    assert jnp.allclose(loss_odd, ref_odd, rtol=1e-5, atol=1e-6), (loss_odd, ref_odd)

    # 128-divisible but non-tile-divisible — exercises the zero-copy
    # multi-tile + in-kernel ragged-row-mask path (19 rows -> 2 tiles of 16).
    rg = (1, 1, 19, 128)
    rvv, rvh = jax.random.normal(k1, rg), jax.random.normal(k2, rg)
    gvv, gvh = jax.random.normal(k3, rg), jax.random.normal(k4, rg)
    loss_rg = jax.block_until_ready(
        pairwise_difference_loss(rvv, rvh, gvv, gvh, mode="l2"))
    ref_rg = jnp.mean(((gvv - gvh) - (rvv - rvh)) ** 2)
    assert jnp.allclose(loss_rg, ref_rg, rtol=1e-5, atol=1e-6), (loss_rg, ref_rg)

    print("KERNEL_OK")
</pallas_src>

<mosaic_0001>
module attributes {stable_mosaic.version = 11 : i64} {
  func.func @_pdl_partial_kernel(%arg0: i32, %arg1: memref<16x128xf32, #tpu.memory_space<vmem>>, %arg2: memref<16x128xf32, #tpu.memory_space<vmem>>, %arg3: memref<16x128xf32, #tpu.memory_space<vmem>>, %arg4: memref<16x128xf32, #tpu.memory_space<vmem>>, %arg5: memref<1x8x128xf32, #tpu.memory_space<vmem>>) attributes {dimension_semantics = [#tpu.dimension_semantics<parallel>], iteration_bounds = array<i64: 1>, scalar_prefetch = 0 : i64, scratch_operands = 0 : i64, tpu.core_type = #tpu.core_type<tc>, window_params = [{transform_indices = @transform_0, window_bounds = array<i64: 16, 128>}, {transform_indices = @transform_1, window_bounds = array<i64: 16, 128>}, {transform_indices = @transform_2, window_bounds = array<i64: 16, 128>}, {transform_indices = @transform_3, window_bounds = array<i64: 16, 128>}, {transform_indices = @transform_4, window_bounds = array<i64: 1, 8, 128>}]} {
    %c0 = arith.constant 0 : index
    %c0_0 = arith.constant 0 : index
    %0 = vector.load %arg1[%c0, %c0_0] : memref<16x128xf32, #tpu.memory_space<vmem>>, vector<16x128xf32>
    %c0_1 = arith.constant 0 : index
    %c0_2 = arith.constant 0 : index
    %1 = vector.load %arg2[%c0_1, %c0_2] : memref<16x128xf32, #tpu.memory_space<vmem>>, vector<16x128xf32>
    %2 = arith.subf %0, %1 : vector<16x128xf32>
    %c0_3 = arith.constant 0 : index
    %c0_4 = arith.constant 0 : index
    %3 = vector.load %arg3[%c0_3, %c0_4] : memref<16x128xf32, #tpu.memory_space<vmem>>, vector<16x128xf32>
    %c0_5 = arith.constant 0 : index
    %c0_6 = arith.constant 0 : index
    %4 = vector.load %arg4[%c0_5, %c0_6] : memref<16x128xf32, #tpu.memory_space<vmem>>, vector<16x128xf32>
    %5 = arith.subf %3, %4 : vector<16x128xf32>
    %6 = arith.subf %5, %2 : vector<16x128xf32>
    %7 = math.absf %6 : vector<16x128xf32>
    %8 = vector.shape_cast %7 : vector<16x128xf32> to vector<2x8x128xf32>
    %cst = arith.constant dense<0.000000e+00> : vector<8x128xf32>
    %9 = vector.multi_reduction <add>, %8, %cst [0] : vector<2x8x128xf32> to vector<8x128xf32>
    %c0_7 = arith.constant 0 : index
    %c0_8 = arith.constant 0 : index
    %c0_9 = arith.constant 0 : index
    %10 = vector.load %arg5[%c0_7, %c0_8, %c0_9] : memref<1x8x128xf32, #tpu.memory_space<vmem>>, vector<1x8x128xf32>
    %11 = vector.shape_cast %10 : vector<1x8x128xf32> to vector<8x128xf32>
    %12 = vector.shape_cast %9 : vector<8x128xf32> to vector<1x8x128xf32>
    tpu.vector_store %arg5[%c0_7, %c0_8, %c0_9], %12 {strides = array<i32>} : memref<1x8x128xf32, #tpu.memory_space<vmem>>, vector<1x8x128xf32>,
    return
  }
  func.func @transform_0(%arg0: i32) -> (i32, i32) {
    %c0_i32 = arith.constant 0 : i32
    %c0_i32_0 = arith.constant 0 : i32
    return %arg0, %c0_i32 : i32, i32
  }
  func.func @transform_1(%arg0: i32) -> (i32, i32) {
    %c0_i32 = arith.constant 0 : i32
    %c0_i32_0 = arith.constant 0 : i32
    return %arg0, %c0_i32 : i32, i32
  }
  func.func @transform_2(%arg0: i32) -> (i32, i32) {
    %c0_i32 = arith.constant 0 : i32
    %c0_i32_0 = arith.constant 0 : i32
    return %arg0, %c0_i32 : i32, i32
  }
  func.func @transform_3(%arg0: i32) -> (i32, i32) {
    %c0_i32 = arith.constant 0 : i32
    %c0_i32_0 = arith.constant 0 : i32
    return %arg0, %c0_i32 : i32, i32
  }
  func.func @transform_4(%arg0: i32) -> (i32, i32, i32) {
    %c0_i32 = arith.constant 0 : i32
    %c0_i32_0 = arith.constant 0 : i32
    %c0_i32_1 = arith.constant 0 : i32
    return %arg0, %c0_i32, %c0_i32_0 : i32, i32, i32
  }
}

</mosaic_0001>

<llo_original>
// kernel: tpu_custom_call.1
$region0: #{tpu_custom_call.1}
  #allocation0 [shape = 'u32[]', space=smem, size = 0x4, offset = 0x4, fixed_abs, tag = 'smem constant byte address 0x4 - core index']
  #allocation1 [shape = 'u32[144,128]{1,0:T(1,128)}', space=vmem, size = 0x12000, scoped, tag = 'internal scratch']
  %s0 = inlined_call_operand.hbm [shape: f32[16,128], index: 0, kind: input, shape index: {}]
  %s1 = inlined_call_operand.hbm [shape: f32[16,128], index: 1, kind: input, shape index: {}]
  %s2 = inlined_call_operand.hbm [shape: f32[16,128], index: 2, kind: input, shape index: {}]
  %s3 = inlined_call_operand.hbm [shape: f32[16,128], index: 3, kind: input, shape index: {}]
  %s4 = inlined_call_operand.hbm [shape: f32[1,8,128], index: 4, kind: output, shape index: {}]
  %s5 = sld [smem:[#allocation0]]
  $region42: #{tpu_custom_call.1} parent=0
    _
  %s7 = ssub.s32 1, %s5
  %s8 = scalar_select 0, %s7, %s5
  $region1: #{tpu_custom_call.1} parent=0
    #allocation2 [shape = 'u8[8192]{0}', space=vmem, size = 0x2000, scoped, tag = 'input window, operand 0, single buffered']
    #allocation3 [shape = 's32[1]{0}', space=sflag, size = 0x4, scoped, tag = 'scoped memory for tpu_custom_call.1']
    #allocation4 [shape = 's32[1]{0}', space=sflag, size = 0x4, scoped, tag = 'scoped memory for tpu_custom_call.1']
    #allocation5 [shape = 'u8[8192]{0}', space=vmem, size = 0x2000, scoped, tag = 'input window, operand 1, single buffered']
    #allocation6 [shape = 's32[1]{0}', space=sflag, size = 0x4, scoped, tag = 'scoped memory for tpu_custom_call.1']
    #allocation7 [shape = 'u8[8192]{0}', space=vmem, size = 0x2000, scoped, tag = 'input window, operand 2, single buffered']
    #allocation8 [shape = 'u8[8192]{0}', space=vmem, size = 0x2000, scoped, tag = 'input window, operand 3, single buffered']
    #allocation9 [shape = 's32[1]{0}', space=sflag, size = 0x4, scoped, tag = 'scoped memory for tpu_custom_call.1']
    #allocation10 [shape = 'u8[4096]{0}', space=vmem, size = 0x1000, scoped, tag = 'output window, operand 0, single buffered']
    %9 = vsyncpa [#allocation3], 0
    %10 = vsyncpa [#allocation6], 0
    %11 = vsyncpa [#allocation9], 0
    %12 = vsyncpa [#allocation4], 0
    // Predicated region
    $region2: #{tpu_custom_call.1} parent=1 // pred_check
      _
    $region3: #{tpu_custom_call.1} parent=1 // pred_check_branch
      %14 = sbr.rel (0) target = $region5
    $region4: #{tpu_custom_call.1} parent=1 // pred_region
      %s16 = ssub.s32 256, 256
      %17 = vsyncadd [#allocation3], %s16
      %s18 = sshll.u32 [#allocation2], 4
      %s19 = int_to_ptr.vmem [resolvable:$true] %s18
      %24 = dma.hbm_to_vmem [thread:$0]  %s0, 256, %s19, [#allocation3], 128, 128, 8
    $region5: #{tpu_custom_call.1} parent=1 // pred_fallthru
      _
    // Predicated region
    $region6: #{tpu_custom_call.1} parent=1 // pred_check
      _
    $region7: #{tpu_custom_call.1} parent=1 // pred_check_branch
      %26 = sbr.rel (0) target = $region9
    $region8: #{tpu_custom_call.1} parent=1 // pred_region
      %s28 = ssub.s32 256, 256
      %29 = vsyncadd [#allocation6], %s28
      %s30 = sshll.u32 [#allocation5], 4
      %s31 = int_to_ptr.vmem [resolvable:$true] %s30
      %36 = dma.hbm_to_vmem [thread:$0]  %s1, 256, %s31, [#allocation6], 128, 128, 8
    $region9: #{tpu_custom_call.1} parent=1 // pred_fallthru
      _
    // Predicated region
    $region10: #{tpu_custom_call.1} parent=1 // pred_check
      _
    $region11: #{tpu_custom_call.1} parent=1 // pred_check_branch
      %38 = sbr.rel (0) target = $region13
    $region12: #{tpu_custom_call.1} parent=1 // pred_region
      %s40 = ssub.s32 256, 256
      %41 = vsyncadd [#allocation6], %s40
      %s42 = sshll.u32 [#allocation7], 4
      %s43 = int_to_ptr.vmem [resolvable:$true] %s42
      %48 = dma.hbm_to_vmem [thread:$0]  %s2, 256, %s43, [#allocation6], 128, 128, 8
    $region13: #{tpu_custom_call.1} parent=1 // pred_fallthru
      _
    // Predicated region
    $region14: #{tpu_custom_call.1} parent=1 // pred_check
      _
    $region15: #{tpu_custom_call.1} parent=1 // pred_check_branch
      %50 = sbr.rel (0) target = $region17
    $region16: #{tpu_custom_call.1} parent=1 // pred_region
      %s52 = ssub.s32 256, 256
      %53 = vsyncadd [#allocation9], %s52
      %s54 = sshll.u32 [#allocation8], 4
      %s55 = int_to_ptr.vmem [resolvable:$true] %s54
      %60 = dma.hbm_to_vmem [thread:$0]  %s3, 256, %s55, [#allocation9], 128, 128, 8
    $region17: #{tpu_custom_call.1} parent=1 // pred_fallthru
      _
    // Predicated region
    $region18: #{tpu_custom_call.1} parent=1 // pred_check
      _
    $region19: #{tpu_custom_call.1} parent=1 // pred_check_branch
      %62 = sbr.rel (0) target = $region21
    $region20: #{tpu_custom_call.1} parent=1 // pred_region
      %63 = dma.done [#allocation3], 256
    $region21: #{tpu_custom_call.1} parent=1 // pred_fallthru
      _
    // Predicated region
    $region22: #{tpu_custom_call.1} parent=1 // pred_check
      _
    $region23: #{tpu_custom_call.1} parent=1 // pred_check_branch
      %65 = sbr.rel (0) target = $region25
    $region24: #{tpu_custom_call.1} parent=1 // pred_region
      %66 = dma.done [#allocation6], 256
    $region25: #{tpu_custom_call.1} parent=1 // pred_fallthru
      _
    // Predicated region
    $region26: #{tpu_custom_call.1} parent=1 // pred_check
      _
    $region27: #{tpu_custom_call.1} parent=1 // pred_check_branch
      %68 = sbr.rel (0) target = $region29
    $region28: #{tpu_custom_call.1} parent=1 // pred_region
      %69 = dma.done [#allocation6], 256
    $region29: #{tpu_custom_call.1} parent=1 // pred_fallthru
      _
    // Predicated region
    $region30: #{tpu_custom_call.1} parent=1 // pred_check
      _
    $region31: #{tpu_custom_call.1} parent=1 // pred_check_branch
      %71 = sbr.rel (0) target = $region33
    $region32: #{tpu_custom_call.1} parent=1 // pred_region
      %72 = dma.done [#allocation9], 256
    $region33: #{tpu_custom_call.1} parent=1 // pred_fallthru
      _
    %v73 = vld [vmem:[#allocation2] sm:$0xff]
    %v74 = vld [vmem:[#allocation2 + $0x8] sm:$0xff]
    %v75 = vld [vmem:[#allocation5] sm:$0xff]
    %v76 = vld [vmem:[#allocation5 + $0x8] sm:$0xff]
    %v77 = vsub.f32 %v73, %v75
    %v78 = vsub.f32 %v74, %v76
    %v79 = vld [vmem:[#allocation7] sm:$0xff]
    %v80 = vld [vmem:[#allocation7 + $0x8] sm:$0xff]
    %v81 = vld [vmem:[#allocation8] sm:$0xff]
    %v82 = vld [vmem:[#allocation8 + $0x8] sm:$0xff]
    %v83 = vsub.f32 %v79, %v81
    %v84 = vsub.f32 %v80, %v82
    %v85 = vsub.f32 %v83, %v77
    %v86 = vsub.f32 %v84, %v78
    %v87 = vand.u32 2147483647, %v85
    %v88 = vand.u32 2147483647, %v86
    %v89 = vadd.f32 %v87, %v88
    %90 = vst [vmem:[#allocation10] sm:$0xff] %v89
    // Predicated region
    $region34: #{tpu_custom_call.1} parent=1 // pred_check
      _
    $region35: #{tpu_custom_call.1} parent=1 // pred_check_branch
      %92 = sbr.rel (0) target = $region37
    $region36: #{tpu_custom_call.1} parent=1 // pred_region
      %s94 = ssub.s32 128, 128
      %95 = vsyncadd [#allocation4], %s94
      %s97 = sshll.u32 [#allocation10], 4
      %s98 = int_to_ptr.vmem [resolvable:$true] %s97
      %100 = dma.vmem_to_hbm [thread:$0]  %s98, 128, %s4, [#allocation4]
    $region37: #{tpu_custom_call.1} parent=1 // pred_fallthru
      _
    // Predicated region
    $region38: #{tpu_custom_call.1} parent=1 // pred_check
      _
    $region39: #{tpu_custom_call.1} parent=1 // pred_check_branch
      %102 = sbr.rel (0) target = $region41
    $region40: #{tpu_custom_call.1} parent=1 // pred_region
      %103 = dma.done [#allocation4], 128
    $region41: #{tpu_custom_call.1} parent=1 // pred_fallthru
      _
    %104 = vsyncpa [#allocation3], 1
    %105 = vsyncpa [#allocation6], 1
    %106 = vsyncpa [#allocation9], 1
    %107 = vsyncpa [#allocation4], 1

</llo_original>
